<compile_context>
chip_gen: v7x
topology: tpu7x:2x2x1
jax: 0.10.0
libtpu: 0.0.40
codegen_flags: <defaults>
</compile_context>

<pallas_src>
import functools

import jax
import jax.numpy as jnp
from jax.experimental import pallas as pl
from jax.experimental.pallas import tpu as pltpu

_HALF_LOG_2PI = 0.9189385332046727  # 0.5 * ln(2*pi)
_NUM_CLASSES = 3


# ---------------------------------------------------------------------------
# In-kernel special functions.
# ---------------------------------------------------------------------------
def _stirling_lgamma(z, log_z, inv):
    inv2 = inv * inv
    series = inv * (1.0 / 12.0
                    - inv2 * (1.0 / 360.0
                              - inv2 * (1.0 / 1260.0
                                        - inv2 * (1.0 / 1680.0))))
    return (z - 0.5) * log_z - z + _HALF_LOG_2PI + series


def _stirling_digamma(log_z, inv):
    inv2 = inv * inv
    series = inv2 * (1.0 / 12.0 - inv2 * (1.0 / 120.0 - inv2 * (1.0 / 252.0)))
    return log_z - 0.5 * inv - series


def _shift8_prod(x):
    """z = x + 8 and prod = x(x+1)...(x+7) (for the lgamma shift, x >= 1)."""
    x1 = x + 1.0; x2 = x + 2.0; x3 = x + 3.0
    x4 = x + 4.0; x5 = x + 5.0; x6 = x + 6.0; x7 = x + 7.0
    prod = ((x * x1) * (x2 * x3)) * ((x4 * x5) * (x6 * x7))
    return x + 8.0, prod


def _shift8_prod_recip(x):
    """z, prod, and sum_{k=0..7} 1/(x+k) with a single divide (x >= 1)."""
    x1 = x + 1.0; x2 = x + 2.0; x3 = x + 3.0
    x4 = x + 4.0; x5 = x + 5.0; x6 = x + 6.0; x7 = x + 7.0
    p01 = x * x1; p23 = x2 * x3; p45 = x4 * x5; p67 = x6 * x7
    p0123 = p01 * p23
    p4567 = p45 * p67
    prod = p0123 * p4567
    n0123 = (x + x1) * p23 + (x2 + x3) * p01
    n4567 = (x4 + x5) * p67 + (x6 + x7) * p45
    recip_sum = (n0123 * p4567 + n4567 * p0123) / prod
    return x + 8.0, prod, recip_sum


def _kl_beta(ta, tb, tsum, pa, pb, psum):
    """KL( Beta(ta, tb) || Beta(pa, pb) ); tsum = ta+tb, psum = pa+pb.

    ta, tb, pa, pb >= 1 -> 8-step shift + Stirling.
    tsum, psum >= 7 (concentrations >= 5 by construction) -> direct Stirling.
    Terms are folded into a running accumulator to limit live temporaries.
    """
    # target alpha term:  (ta - pa) * digamma(ta) - lgamma(ta)   (shifted part)
    z, prod_a, rsum = _shift8_prod_recip(ta)
    log_z = jnp.log(z)
    inv = 1.0 / z
    acc = ((ta - pa) * (_stirling_digamma(log_z, inv) - rsum)
           - _stirling_lgamma(z, log_z, inv))

    # target beta term
    z, prod_b, rsum = _shift8_prod_recip(tb)
    log_z = jnp.log(z)
    inv = 1.0 / z
    acc = acc + ((tb - pb) * (_stirling_digamma(log_z, inv) - rsum)
                 - _stirling_lgamma(z, log_z, inv))

    # fused shift correction of -lgamma(ta) - lgamma(tb): one log instead of two
    acc = acc + jnp.log(prod_a * prod_b)

    # target sum term:  +lgamma(tsum) + (psum - tsum) * digamma(tsum)
    log_z = jnp.log(tsum)
    inv = 1.0 / tsum
    acc = acc + (_stirling_lgamma(tsum, log_z, inv)
                 + (psum - tsum) * _stirling_digamma(log_z, inv))

    # prediction normalizer:  +lgamma(pa) + lgamma(pb) - lgamma(psum)
    z, prod_a = _shift8_prod(pa)
    log_z = jnp.log(z)
    acc = acc + _stirling_lgamma(z, log_z, 1.0 / z)
    z, prod_b = _shift8_prod(pb)
    log_z = jnp.log(z)
    acc = acc + _stirling_lgamma(z, log_z, 1.0 / z)
    acc = acc - jnp.log(prod_a * prod_b)
    log_z = jnp.log(psum)
    acc = acc - _stirling_lgamma(psum, log_z, 1.0 / psum)
    return acc


# ---------------------------------------------------------------------------
# Pallas kernel: one grid step per TILE_T timepoints (time on lanes).
# ---------------------------------------------------------------------------
def _kl_beta_loss_kernel(timepoints, packed_ref, out_ref):
    lw = packed_ref[0]      # (B, TILE_T) logit for the mode w
    lc = packed_ref[1]      # (B, TILE_T) logit for the concentration c
    tw = packed_ref[2]      # (B, TILE_T) target mode
    tc = packed_ref[3]      # (B, TILE_T) target concentration
    dx = packed_ref[4]      # (B, TILE_T) class label (0/1/2) as f32
    mask = packed_ref[5]    # (B, TILE_T) 1.0 for valid samples

    # ---- time-dependent class weights: N_t / (num_classes * count_k) ----
    # Reductions are over the batch (sublane) axis; results are (1, TILE_T).
    n_t = jnp.sum(mask, axis=0, keepdims=True)
    c0 = jnp.sum(jnp.where(dx == 0.0, mask, 0.0), axis=0, keepdims=True)
    c1 = jnp.sum(jnp.where(dx == 1.0, mask, 0.0), axis=0, keepdims=True)
    c2 = n_t - c0 - c1
    inv_k = 1.0 / float(_NUM_CLASSES)
    w0 = n_t * inv_k / c0
    w1 = n_t * inv_k / c1
    w2 = n_t * inv_k / c2
    wc = jnp.where(dx == 0.0, w0, jnp.where(dx == 1.0, w1, w2))   # (B, TILE_T)

    # ---- predictions: tanh-form sigmoid; rescale c into [5, 5 + T - 1] ----
    pw = 0.5 * jnp.tanh(0.5 * lw) + 0.5
    pc = (0.5 * jnp.tanh(0.5 * lc) + 0.5) * float(timepoints - 1) + 5.0
    pa = pc * pw + 1.0
    pb = pc * (1.0 - pw) + 1.0
    psum = pc + 2.0                       # >= 7 always

    # ---- targets: reparameterize (w, c) -> (alpha, beta) ----
    ta = tc * tw + 1.0
    tb = tc * (1.0 - tw) + 1.0
    tsum = tc + 2.0                       # >= 7: labels_to_beta keeps c >= 5

    kl = _kl_beta(ta, tb, tsum, pa, pb, psum)                     # (B, TILE_T)

    # mean over valid samples of wc * KL (guarded against 0*inf and n_t == 0)
    contrib = jnp.where(mask > 0.0, wc * kl, 0.0)
    num = jnp.sum(contrib, axis=0, keepdims=True)                 # (1, TILE_T)
    loss_cols = num / jnp.maximum(n_t, 1.0)                       # padded cols -> 0
    partial = jnp.sum(loss_cols, axis=-1, keepdims=True)          # (1, 1)
    out_ref[...] = jnp.broadcast_to(partial[None], out_ref.shape)


# ---------------------------------------------------------------------------
# Wrapper: unpack PyTorch-style padded tensors, pack fields, tile time on lanes.
# ---------------------------------------------------------------------------
def kl_beta_loss(logits, targets, tile_t=None):
    """logits: (B, T, 2), targets: (B, T, 3) with -inf padded rows."""
    B, T, P = logits.shape
    assert P == 2 and targets.shape == (B, T, 3)

    valid = jnp.all(targets > -jnp.inf, axis=-1)                  # (B, T)
    maskf = valid.astype(jnp.float32)

    def plane(x, fill):
        # padded entries replaced by a safe finite value (kept (B, T): lane = T)
        return jnp.where(valid, x.astype(jnp.float32), jnp.float32(fill))

    fields = jnp.stack([
        plane(logits[:, :, 0], 0.0),
        plane(logits[:, :, 1], 0.0),
        plane(targets[:, :, 0], 0.5),
        plane(targets[:, :, 1], 5.0),
        plane(targets[:, :, 2], 0.0),
        maskf,
    ], axis=0)                                                    # (6, B, T)

    # ---- generation-aware tile sizing (time on the 128-wide lane axis) ----
    try:
        info = pltpu.get_tpu_info()
        vmem_cap = int(getattr(info, "vmem_capacity_bytes", 64 << 20))
    except Exception:
        vmem_cap = 64 << 20                                       # conservative (v7x)
    if vmem_cap >= (100 << 20):        # v5e / v6e: 128 MiB physical VMEM
        in_budget = 24 << 20
    else:                              # v7x: 64 MiB per TensorCore
        in_budget = 12 << 20
    vmem_limit = in_budget + (8 << 20)

    bytes_per_t = 6 * B * 4 * 2        # 6 planes, f32, double-buffered
    cap = max(128, (in_budget // bytes_per_t) // 128 * 128)

    t_pad128 = -(-T // 128) * 128
    tile = cap if tile_t is None else max(128, -(-tile_t // 128) * 128)
    tile = min(tile, t_pad128)
    # guarantee >= 2 grid steps when T allows so v7x's two TensorCores both work
    if t_pad128 >= 256:
        tile = min(tile, max(128, ((t_pad128 + 255) // 256) * 128))
    t_pad = -(-t_pad128 // tile) * tile
    if t_pad != T:
        fields = jnp.pad(fields, ((0, 0), (0, 0), (0, t_pad - T)))   # mask=0 cols
    num_tiles = t_pad // tile

    kernel = functools.partial(_kl_beta_loss_kernel, T)
    out = pl.pallas_call(
        kernel,
        out_shape=jax.ShapeDtypeStruct((num_tiles, 8, 128), jnp.float32),
        grid=(num_tiles,),
        in_specs=[pl.BlockSpec((6, B, tile), lambda i: (0, 0, i))],
        out_specs=pl.BlockSpec((1, 8, 128), lambda i: (i, 0, 0)),
        compiler_params=pltpu.CompilerParams(
            dimension_semantics=("parallel",),
            vmem_limit_bytes=vmem_limit),
    )(fields)

    return jnp.sum(out[:, 0, 0]) / jnp.float32(T)


# ---------------------------------------------------------------------------
# Pure-JAX reference (mirrors the PyTorch forward) for verification.
# ---------------------------------------------------------------------------
def kl_beta_loss_ref(logits, targets):
    from jax.scipy.special import gammaln, digamma
    B, T, _ = logits.shape
    valid = jnp.all(targets > -jnp.inf, axis=-1)                  # (B, T)
    total = jnp.float32(0.0)
    for t in range(T):
        m = valid[:, t]
        dx = jnp.where(m, targets[:, t, 2], 0.0)
        counts = jnp.stack(
            [jnp.sum((m & (dx == k)).astype(jnp.float32)) for k in range(3)])
        n_t = jnp.sum(counts)
        weights = n_t / (3.0 * counts)
        wc = weights[dx.astype(jnp.int32)]
        lw = jnp.where(m, logits[:, t, 0], 0.0)
        lc = jnp.where(m, logits[:, t, 1], 0.0)
        pw = jax.nn.sigmoid(lw)
        pc = jax.nn.sigmoid(lc) * (T - 1) + 5.0
        pa, pb = pc * pw + 1.0, pc * (1.0 - pw) + 1.0
        tw = jnp.where(m, targets[:, t, 0], 0.5)
        tc = jnp.where(m, targets[:, t, 1], 5.0)
        ta, tb = tc * tw + 1.0, tc * (1.0 - tw) + 1.0
        kl = (gammaln(pa) + gammaln(pb) - gammaln(pa + pb)
              - (gammaln(ta) + gammaln(tb) - gammaln(ta + tb))
              + (ta - pa) * digamma(ta)
              + (tb - pb) * digamma(tb)
              + (pa - ta + pb - tb) * digamma(ta + tb))
        total = total + jnp.sum(jnp.where(m, wc * kl, 0.0)) / n_t
    return total / T


# TODO(synk): KLBeta.labels_to_beta (host-side sequential label preprocessing)
# is not part of the forward pass and is intentionally not implemented here.

if __name__ == "__main__":
    key = jax.random.PRNGKey(0)
    k1, k2, k3, k4 = jax.random.split(key, 4)

    B, T = 8, 8
    logits = jax.random.normal(k1, (B, T, 2), jnp.float32)
    dx = jax.random.randint(k2, (B, T), 0, 3).astype(jnp.float32)
    w = jax.random.uniform(k3, (B, T), minval=0.2, maxval=0.8)
    c = jax.random.uniform(k4, (B, T), minval=5.0, maxval=12.0)
    targets = jnp.stack([w, c, dx], axis=-1)                      # (B, T, 3)

    # variable-length sequences, padded with -inf (as pad_sequence would)
    lengths = jnp.array([T, T - 2, T - 1, 3, T, 5, 2, T - 3])
    valid = jnp.arange(T)[None, :] < lengths[:, None]              # (B, T)
    neg_inf = jnp.float32(-jnp.inf)
    logits = jnp.where(valid[:, :, None], logits, neg_inf)
    targets = jnp.where(valid[:, :, None], targets, neg_inf)

    loss = kl_beta_loss(logits, targets)
    jax.block_until_ready(loss)

    ref = kl_beta_loss_ref(logits, targets)
    assert bool(jnp.isfinite(loss)), "kernel produced non-finite loss"
    err = abs(float(loss) - float(ref))
    assert err < 1e-3 * max(1.0, abs(float(ref))), (float(loss), float(ref))

    print("KERNEL_OK")
</pallas_src>

<mosaic_0001>
module attributes {stable_mosaic.version = 11 : i64} {
  func.func @_kl_beta_loss_kernel(%arg0: i32, %arg1: memref<6x8x128xf32, #tpu.memory_space<vmem>>, %arg2: memref<1x8x128xf32, #tpu.memory_space<vmem>>) attributes {dimension_semantics = [#tpu.dimension_semantics<parallel>], iteration_bounds = array<i64: 1>, scalar_prefetch = 0 : i64, scratch_operands = 0 : i64, tpu.core_type = #tpu.core_type<tc>, window_params = [{transform_indices = @transform_0, window_bounds = array<i64: 6, 8, 128>}, {transform_indices = @transform_1, window_bounds = array<i64: 1, 8, 128>}]} {
    %c0 = arith.constant 0 : index
    %c0_0 = arith.constant 0 : index
    %c0_1 = arith.constant 0 : index
    %0 = vector.load %arg1[%c0, %c0_0, %c0_1] : memref<6x8x128xf32, #tpu.memory_space<vmem>>, vector<1x8x128xf32>
    %1 = vector.shape_cast %0 : vector<1x8x128xf32> to vector<8x128xf32>
    %c1 = arith.constant 1 : index
    %c0_2 = arith.constant 0 : index
    %c0_3 = arith.constant 0 : index
    %2 = vector.load %arg1[%c1, %c0_2, %c0_3] : memref<6x8x128xf32, #tpu.memory_space<vmem>>, vector<1x8x128xf32>
    %3 = vector.shape_cast %2 : vector<1x8x128xf32> to vector<8x128xf32>
    %c2 = arith.constant 2 : index
    %c0_4 = arith.constant 0 : index
    %c0_5 = arith.constant 0 : index
    %4 = vector.load %arg1[%c2, %c0_4, %c0_5] : memref<6x8x128xf32, #tpu.memory_space<vmem>>, vector<1x8x128xf32>
    %5 = vector.shape_cast %4 : vector<1x8x128xf32> to vector<8x128xf32>
    %c3 = arith.constant 3 : index
    %c0_6 = arith.constant 0 : index
    %c0_7 = arith.constant 0 : index
    %6 = vector.load %arg1[%c3, %c0_6, %c0_7] : memref<6x8x128xf32, #tpu.memory_space<vmem>>, vector<1x8x128xf32>
    %7 = vector.shape_cast %6 : vector<1x8x128xf32> to vector<8x128xf32>
    %c4 = arith.constant 4 : index
    %c0_8 = arith.constant 0 : index
    %c0_9 = arith.constant 0 : index
    %8 = vector.load %arg1[%c4, %c0_8, %c0_9] : memref<6x8x128xf32, #tpu.memory_space<vmem>>, vector<1x8x128xf32>
    %9 = vector.shape_cast %8 : vector<1x8x128xf32> to vector<8x128xf32>
    %c5 = arith.constant 5 : index
    %c0_10 = arith.constant 0 : index
    %c0_11 = arith.constant 0 : index
    %10 = vector.load %arg1[%c5, %c0_10, %c0_11] : memref<6x8x128xf32, #tpu.memory_space<vmem>>, vector<1x8x128xf32>
    %11 = vector.shape_cast %10 : vector<1x8x128xf32> to vector<8x128xf32>
    %cst = arith.constant dense<0.000000e+00> : vector<128xf32>
    %12 = vector.multi_reduction <add>, %11, %cst [0] : vector<8x128xf32> to vector<128xf32>
    %13 = vector.shape_cast %12 : vector<128xf32> to vector<1x128xf32>
    %cst_12 = arith.constant 0.000000e+00 : f32
    %14 = vector.broadcast %cst_12 : f32 to vector<8x128xf32>
    %15 = arith.cmpf oeq, %9, %14 : vector<8x128xf32>
    %cst_13 = arith.constant 0.000000e+00 : f32
    %16 = vector.broadcast %cst_13 : f32 to vector<8x128xf32>
    %17 = arith.select %15, %11, %16 : vector<8x128xi1>, vector<8x128xf32>
    %cst_14 = arith.constant dense<0.000000e+00> : vector<128xf32>
    %18 = vector.multi_reduction <add>, %17, %cst_14 [0] : vector<8x128xf32> to vector<128xf32>
    %19 = vector.shape_cast %18 : vector<128xf32> to vector<1x128xf32>
    %cst_15 = arith.constant 1.000000e+00 : f32
    %20 = vector.broadcast %cst_15 : f32 to vector<8x128xf32>
    %21 = arith.cmpf oeq, %9, %20 : vector<8x128xf32>
    %cst_16 = arith.constant 0.000000e+00 : f32
    %22 = vector.broadcast %cst_16 : f32 to vector<8x128xf32>
    %23 = arith.select %21, %11, %22 : vector<8x128xi1>, vector<8x128xf32>
    %cst_17 = arith.constant dense<0.000000e+00> : vector<128xf32>
    %24 = vector.multi_reduction <add>, %23, %cst_17 [0] : vector<8x128xf32> to vector<128xf32>
    %25 = vector.shape_cast %24 : vector<128xf32> to vector<1x128xf32>
    %26 = arith.subf %13, %19 : vector<1x128xf32>
    %27 = arith.subf %26, %25 : vector<1x128xf32>
    %cst_18 = arith.constant 0.333333343 : f32
    %28 = vector.broadcast %cst_18 : f32 to vector<1x128xf32>
    %29 = arith.mulf %13, %28 : vector<1x128xf32>
    %30 = arith.divf %29, %19 : vector<1x128xf32>
    %cst_19 = arith.constant 0.333333343 : f32
    %31 = vector.broadcast %cst_19 : f32 to vector<1x128xf32>
    %32 = arith.mulf %13, %31 : vector<1x128xf32>
    %33 = arith.divf %32, %25 : vector<1x128xf32>
    %cst_20 = arith.constant 0.333333343 : f32
    %34 = vector.broadcast %cst_20 : f32 to vector<1x128xf32>
    %35 = arith.mulf %13, %34 : vector<1x128xf32>
    %36 = arith.divf %35, %27 : vector<1x128xf32>
    %cst_21 = arith.constant 0.000000e+00 : f32
    %37 = vector.broadcast %cst_21 : f32 to vector<8x128xf32>
    %38 = arith.cmpf oeq, %9, %37 : vector<8x128xf32>
    %cst_22 = arith.constant 1.000000e+00 : f32
    %39 = vector.broadcast %cst_22 : f32 to vector<8x128xf32>
    %40 = arith.cmpf oeq, %9, %39 : vector<8x128xf32>
    %41 = vector.shape_cast %33 : vector<1x128xf32> to vector<1x128xf32>
    %42 = vector.broadcast %41 : vector<1x128xf32> to vector<8x128xf32>
    %43 = vector.shape_cast %36 : vector<1x128xf32> to vector<1x128xf32>
    %44 = vector.broadcast %43 : vector<1x128xf32> to vector<8x128xf32>
    %45 = arith.select %40, %42, %44 : vector<8x128xi1>, vector<8x128xf32>
    %46 = vector.shape_cast %30 : vector<1x128xf32> to vector<1x128xf32>
    %47 = vector.broadcast %46 : vector<1x128xf32> to vector<8x128xf32>
    %48 = arith.select %38, %47, %45 : vector<8x128xi1>, vector<8x128xf32>
    %cst_23 = arith.constant 5.000000e-01 : f32
    %49 = vector.broadcast %cst_23 : f32 to vector<8x128xf32>
    %50 = arith.mulf %49, %1 : vector<8x128xf32>
    %51 = math.tanh %50 : vector<8x128xf32>
    %cst_24 = arith.constant 5.000000e-01 : f32
    %52 = vector.broadcast %cst_24 : f32 to vector<8x128xf32>
    %53 = arith.mulf %52, %51 : vector<8x128xf32>
    %cst_25 = arith.constant 5.000000e-01 : f32
    %54 = vector.broadcast %cst_25 : f32 to vector<8x128xf32>
    %55 = arith.addf %53, %54 : vector<8x128xf32>
    %cst_26 = arith.constant 5.000000e-01 : f32
    %56 = vector.broadcast %cst_26 : f32 to vector<8x128xf32>
    %57 = arith.mulf %56, %3 : vector<8x128xf32>
    %58 = math.tanh %57 : vector<8x128xf32>
    %cst_27 = arith.constant 5.000000e-01 : f32
    %59 = vector.broadcast %cst_27 : f32 to vector<8x128xf32>
    %60 = arith.mulf %59, %58 : vector<8x128xf32>
    %cst_28 = arith.constant 5.000000e-01 : f32
    %61 = vector.broadcast %cst_28 : f32 to vector<8x128xf32>
    %62 = arith.addf %60, %61 : vector<8x128xf32>
    %cst_29 = arith.constant 7.000000e+00 : f32
    %63 = vector.broadcast %cst_29 : f32 to vector<8x128xf32>
    %64 = arith.mulf %62, %63 : vector<8x128xf32>
    %cst_30 = arith.constant 5.000000e+00 : f32
    %65 = vector.broadcast %cst_30 : f32 to vector<8x128xf32>
    %66 = arith.addf %64, %65 : vector<8x128xf32>
    %67 = arith.mulf %66, %55 : vector<8x128xf32>
    %cst_31 = arith.constant 1.000000e+00 : f32
    %68 = vector.broadcast %cst_31 : f32 to vector<8x128xf32>
    %69 = arith.addf %67, %68 : vector<8x128xf32>
    %cst_32 = arith.constant 1.000000e+00 : f32
    %70 = vector.broadcast %cst_32 : f32 to vector<8x128xf32>
    %71 = arith.subf %70, %55 : vector<8x128xf32>
    %72 = arith.mulf %66, %71 : vector<8x128xf32>
    %cst_33 = arith.constant 1.000000e+00 : f32
    %73 = vector.broadcast %cst_33 : f32 to vector<8x128xf32>
    %74 = arith.addf %72, %73 : vector<8x128xf32>
    %cst_34 = arith.constant 2.000000e+00 : f32
    %75 = vector.broadcast %cst_34 : f32 to vector<8x128xf32>
    %76 = arith.addf %66, %75 : vector<8x128xf32>
    %77 = arith.mulf %7, %5 : vector<8x128xf32>
    %cst_35 = arith.constant 1.000000e+00 : f32
    %78 = vector.broadcast %cst_35 : f32 to vector<8x128xf32>
    %79 = arith.addf %77, %78 : vector<8x128xf32>
    %cst_36 = arith.constant 1.000000e+00 : f32
    %80 = vector.broadcast %cst_36 : f32 to vector<8x128xf32>
    %81 = arith.subf %80, %5 : vector<8x128xf32>
    %82 = arith.mulf %7, %81 : vector<8x128xf32>
    %cst_37 = arith.constant 1.000000e+00 : f32
    %83 = vector.broadcast %cst_37 : f32 to vector<8x128xf32>
    %84 = arith.addf %82, %83 : vector<8x128xf32>
    %cst_38 = arith.constant 2.000000e+00 : f32
    %85 = vector.broadcast %cst_38 : f32 to vector<8x128xf32>
    %86 = arith.addf %7, %85 : vector<8x128xf32>
    %cst_39 = arith.constant 1.000000e+00 : f32
    %87 = vector.broadcast %cst_39 : f32 to vector<8x128xf32>
    %88 = arith.addf %79, %87 : vector<8x128xf32>
    %cst_40 = arith.constant 2.000000e+00 : f32
    %89 = vector.broadcast %cst_40 : f32 to vector<8x128xf32>
    %90 = arith.addf %79, %89 : vector<8x128xf32>
    %cst_41 = arith.constant 3.000000e+00 : f32
    %91 = vector.broadcast %cst_41 : f32 to vector<8x128xf32>
    %92 = arith.addf %79, %91 : vector<8x128xf32>
    %cst_42 = arith.constant 4.000000e+00 : f32
    %93 = vector.broadcast %cst_42 : f32 to vector<8x128xf32>
    %94 = arith.addf %79, %93 : vector<8x128xf32>
    %cst_43 = arith.constant 5.000000e+00 : f32
    %95 = vector.broadcast %cst_43 : f32 to vector<8x128xf32>
    %96 = arith.addf %79, %95 : vector<8x128xf32>
    %cst_44 = arith.constant 6.000000e+00 : f32
    %97 = vector.broadcast %cst_44 : f32 to vector<8x128xf32>
    %98 = arith.addf %79, %97 : vector<8x128xf32>
    %cst_45 = arith.constant 7.000000e+00 : f32
    %99 = vector.broadcast %cst_45 : f32 to vector<8x128xf32>
    %100 = arith.addf %79, %99 : vector<8x128xf32>
    %101 = arith.mulf %79, %88 : vector<8x128xf32>
    %102 = arith.mulf %90, %92 : vector<8x128xf32>
    %103 = arith.mulf %94, %96 : vector<8x128xf32>
    %104 = arith.mulf %98, %100 : vector<8x128xf32>
    %105 = arith.mulf %101, %102 : vector<8x128xf32>
    %106 = arith.mulf %103, %104 : vector<8x128xf32>
    %107 = arith.mulf %105, %106 : vector<8x128xf32>
    %108 = arith.addf %79, %88 : vector<8x128xf32>
    %109 = arith.mulf %108, %102 : vector<8x128xf32>
    %110 = arith.addf %90, %92 : vector<8x128xf32>
    %111 = arith.mulf %110, %101 : vector<8x128xf32>
    %112 = arith.addf %109, %111 : vector<8x128xf32>
    %113 = arith.addf %94, %96 : vector<8x128xf32>
    %114 = arith.mulf %113, %104 : vector<8x128xf32>
    %115 = arith.addf %98, %100 : vector<8x128xf32>
    %116 = arith.mulf %115, %103 : vector<8x128xf32>
    %117 = arith.addf %114, %116 : vector<8x128xf32>
    %118 = arith.mulf %112, %106 : vector<8x128xf32>
    %119 = arith.mulf %117, %105 : vector<8x128xf32>
    %120 = arith.addf %118, %119 : vector<8x128xf32>
    %121 = arith.divf %120, %107 : vector<8x128xf32>
    %cst_46 = arith.constant 8.000000e+00 : f32
    %122 = vector.broadcast %cst_46 : f32 to vector<8x128xf32>
    %123 = arith.addf %79, %122 : vector<8x128xf32>
    %124 = math.log %123 : vector<8x128xf32>
    %cst_47 = arith.constant 1.000000e+00 : f32
    %125 = vector.broadcast %cst_47 : f32 to vector<8x128xf32>
    %126 = arith.divf %125, %123 : vector<8x128xf32>
    %127 = arith.subf %79, %69 : vector<8x128xf32>
    %128 = arith.mulf %126, %126 : vector<8x128xf32>
    %cst_48 = arith.constant 0.0039682542 : f32
    %129 = vector.broadcast %cst_48 : f32 to vector<8x128xf32>
    %130 = arith.mulf %128, %129 : vector<8x128xf32>
    %cst_49 = arith.constant 0.00833333377 : f32
    %131 = vector.broadcast %cst_49 : f32 to vector<8x128xf32>
    %132 = arith.subf %131, %130 : vector<8x128xf32>
    %133 = arith.mulf %128, %132 : vector<8x128xf32>
    %cst_50 = arith.constant 0.0833333358 : f32
    %134 = vector.broadcast %cst_50 : f32 to vector<8x128xf32>
    %135 = arith.subf %134, %133 : vector<8x128xf32>
    %136 = arith.mulf %128, %135 : vector<8x128xf32>
    %cst_51 = arith.constant 5.000000e-01 : f32
    %137 = vector.broadcast %cst_51 : f32 to vector<8x128xf32>
    %138 = arith.mulf %137, %126 : vector<8x128xf32>
    %139 = arith.subf %124, %138 : vector<8x128xf32>
    %140 = arith.subf %139, %136 : vector<8x128xf32>
    %141 = arith.subf %140, %121 : vector<8x128xf32>
    %142 = arith.mulf %127, %141 : vector<8x128xf32>
    %143 = arith.mulf %126, %126 : vector<8x128xf32>
    %cst_52 = arith.constant 5.95238118E-4 : f32
    %144 = vector.broadcast %cst_52 : f32 to vector<8x128xf32>
    %145 = arith.mulf %143, %144 : vector<8x128xf32>
    %cst_53 = arith.constant 7.93650805E-4 : f32
    %146 = vector.broadcast %cst_53 : f32 to vector<8x128xf32>
    %147 = arith.subf %146, %145 : vector<8x128xf32>
    %148 = arith.mulf %143, %147 : vector<8x128xf32>
    %cst_54 = arith.constant 0.00277777785 : f32
    %149 = vector.broadcast %cst_54 : f32 to vector<8x128xf32>
    %150 = arith.subf %149, %148 : vector<8x128xf32>
    %151 = arith.mulf %143, %150 : vector<8x128xf32>
    %cst_55 = arith.constant 0.0833333358 : f32
    %152 = vector.broadcast %cst_55 : f32 to vector<8x128xf32>
    %153 = arith.subf %152, %151 : vector<8x128xf32>
    %154 = arith.mulf %126, %153 : vector<8x128xf32>
    %cst_56 = arith.constant 5.000000e-01 : f32
    %155 = vector.broadcast %cst_56 : f32 to vector<8x128xf32>
    %156 = arith.subf %123, %155 : vector<8x128xf32>
    %157 = arith.mulf %156, %124 : vector<8x128xf32>
    %158 = arith.subf %157, %123 : vector<8x128xf32>
    %cst_57 = arith.constant 0.918938517 : f32
    %159 = vector.broadcast %cst_57 : f32 to vector<8x128xf32>
    %160 = arith.addf %158, %159 : vector<8x128xf32>
    %161 = arith.addf %160, %154 : vector<8x128xf32>
    %162 = arith.subf %142, %161 : vector<8x128xf32>
    %cst_58 = arith.constant 1.000000e+00 : f32
    %163 = vector.broadcast %cst_58 : f32 to vector<8x128xf32>
    %164 = arith.addf %84, %163 : vector<8x128xf32>
    %cst_59 = arith.constant 2.000000e+00 : f32
    %165 = vector.broadcast %cst_59 : f32 to vector<8x128xf32>
    %166 = arith.addf %84, %165 : vector<8x128xf32>
    %cst_60 = arith.constant 3.000000e+00 : f32
    %167 = vector.broadcast %cst_60 : f32 to vector<8x128xf32>
    %168 = arith.addf %84, %167 : vector<8x128xf32>
    %cst_61 = arith.constant 4.000000e+00 : f32
    %169 = vector.broadcast %cst_61 : f32 to vector<8x128xf32>
    %170 = arith.addf %84, %169 : vector<8x128xf32>
    %cst_62 = arith.constant 5.000000e+00 : f32
    %171 = vector.broadcast %cst_62 : f32 to vector<8x128xf32>
    %172 = arith.addf %84, %171 : vector<8x128xf32>
    %cst_63 = arith.constant 6.000000e+00 : f32
    %173 = vector.broadcast %cst_63 : f32 to vector<8x128xf32>
    %174 = arith.addf %84, %173 : vector<8x128xf32>
    %cst_64 = arith.constant 7.000000e+00 : f32
    %175 = vector.broadcast %cst_64 : f32 to vector<8x128xf32>
    %176 = arith.addf %84, %175 : vector<8x128xf32>
    %177 = arith.mulf %84, %164 : vector<8x128xf32>
    %178 = arith.mulf %166, %168 : vector<8x128xf32>
    %179 = arith.mulf %170, %172 : vector<8x128xf32>
    %180 = arith.mulf %174, %176 : vector<8x128xf32>
    %181 = arith.mulf %177, %178 : vector<8x128xf32>
    %182 = arith.mulf %179, %180 : vector<8x128xf32>
    %183 = arith.mulf %181, %182 : vector<8x128xf32>
    %184 = arith.addf %84, %164 : vector<8x128xf32>
    %185 = arith.mulf %184, %178 : vector<8x128xf32>
    %186 = arith.addf %166, %168 : vector<8x128xf32>
    %187 = arith.mulf %186, %177 : vector<8x128xf32>
    %188 = arith.addf %185, %187 : vector<8x128xf32>
    %189 = arith.addf %170, %172 : vector<8x128xf32>
    %190 = arith.mulf %189, %180 : vector<8x128xf32>
    %191 = arith.addf %174, %176 : vector<8x128xf32>
    %192 = arith.mulf %191, %179 : vector<8x128xf32>
    %193 = arith.addf %190, %192 : vector<8x128xf32>
    %194 = arith.mulf %188, %182 : vector<8x128xf32>
    %195 = arith.mulf %193, %181 : vector<8x128xf32>
    %196 = arith.addf %194, %195 : vector<8x128xf32>
    %197 = arith.divf %196, %183 : vector<8x128xf32>
    %cst_65 = arith.constant 8.000000e+00 : f32
    %198 = vector.broadcast %cst_65 : f32 to vector<8x128xf32>
    %199 = arith.addf %84, %198 : vector<8x128xf32>
    %200 = math.log %199 : vector<8x128xf32>
    %cst_66 = arith.constant 1.000000e+00 : f32
    %201 = vector.broadcast %cst_66 : f32 to vector<8x128xf32>
    %202 = arith.divf %201, %199 : vector<8x128xf32>
    %203 = arith.subf %84, %74 : vector<8x128xf32>
    %204 = arith.mulf %202, %202 : vector<8x128xf32>
    %cst_67 = arith.constant 0.0039682542 : f32
    %205 = vector.broadcast %cst_67 : f32 to vector<8x128xf32>
    %206 = arith.mulf %204, %205 : vector<8x128xf32>
    %cst_68 = arith.constant 0.00833333377 : f32
    %207 = vector.broadcast %cst_68 : f32 to vector<8x128xf32>
    %208 = arith.subf %207, %206 : vector<8x128xf32>
    %209 = arith.mulf %204, %208 : vector<8x128xf32>
    %cst_69 = arith.constant 0.0833333358 : f32
    %210 = vector.broadcast %cst_69 : f32 to vector<8x128xf32>
    %211 = arith.subf %210, %209 : vector<8x128xf32>
    %212 = arith.mulf %204, %211 : vector<8x128xf32>
    %cst_70 = arith.constant 5.000000e-01 : f32
    %213 = vector.broadcast %cst_70 : f32 to vector<8x128xf32>
    %214 = arith.mulf %213, %202 : vector<8x128xf32>
    %215 = arith.subf %200, %214 : vector<8x128xf32>
    %216 = arith.subf %215, %212 : vector<8x128xf32>
    %217 = arith.subf %216, %197 : vector<8x128xf32>
    %218 = arith.mulf %203, %217 : vector<8x128xf32>
    %219 = arith.mulf %202, %202 : vector<8x128xf32>
    %cst_71 = arith.constant 5.95238118E-4 : f32
    %220 = vector.broadcast %cst_71 : f32 to vector<8x128xf32>
    %221 = arith.mulf %219, %220 : vector<8x128xf32>
    %cst_72 = arith.constant 7.93650805E-4 : f32
    %222 = vector.broadcast %cst_72 : f32 to vector<8x128xf32>
    %223 = arith.subf %222, %221 : vector<8x128xf32>
    %224 = arith.mulf %219, %223 : vector<8x128xf32>
    %cst_73 = arith.constant 0.00277777785 : f32
    %225 = vector.broadcast %cst_73 : f32 to vector<8x128xf32>
    %226 = arith.subf %225, %224 : vector<8x128xf32>
    %227 = arith.mulf %219, %226 : vector<8x128xf32>
    %cst_74 = arith.constant 0.0833333358 : f32
    %228 = vector.broadcast %cst_74 : f32 to vector<8x128xf32>
    %229 = arith.subf %228, %227 : vector<8x128xf32>
    %230 = arith.mulf %202, %229 : vector<8x128xf32>
    %cst_75 = arith.constant 5.000000e-01 : f32
    %231 = vector.broadcast %cst_75 : f32 to vector<8x128xf32>
    %232 = arith.subf %199, %231 : vector<8x128xf32>
    %233 = arith.mulf %232, %200 : vector<8x128xf32>
    %234 = arith.subf %233, %199 : vector<8x128xf32>
    %cst_76 = arith.constant 0.918938517 : f32
    %235 = vector.broadcast %cst_76 : f32 to vector<8x128xf32>
    %236 = arith.addf %234, %235 : vector<8x128xf32>
    %237 = arith.addf %236, %230 : vector<8x128xf32>
    %238 = arith.subf %218, %237 : vector<8x128xf32>
    %239 = arith.addf %162, %238 : vector<8x128xf32>
    %240 = arith.mulf %107, %183 : vector<8x128xf32>
    %241 = math.log %240 : vector<8x128xf32>
    %242 = arith.addf %239, %241 : vector<8x128xf32>
    %243 = math.log %86 : vector<8x128xf32>
    %cst_77 = arith.constant 1.000000e+00 : f32
    %244 = vector.broadcast %cst_77 : f32 to vector<8x128xf32>
    %245 = arith.divf %244, %86 : vector<8x128xf32>
    %246 = arith.mulf %245, %245 : vector<8x128xf32>
    %cst_78 = arith.constant 5.95238118E-4 : f32
    %247 = vector.broadcast %cst_78 : f32 to vector<8x128xf32>
    %248 = arith.mulf %246, %247 : vector<8x128xf32>
    %cst_79 = arith.constant 7.93650805E-4 : f32
    %249 = vector.broadcast %cst_79 : f32 to vector<8x128xf32>
    %250 = arith.subf %249, %248 : vector<8x128xf32>
    %251 = arith.mulf %246, %250 : vector<8x128xf32>
    %cst_80 = arith.constant 0.00277777785 : f32
    %252 = vector.broadcast %cst_80 : f32 to vector<8x128xf32>
    %253 = arith.subf %252, %251 : vector<8x128xf32>
    %254 = arith.mulf %246, %253 : vector<8x128xf32>
    %cst_81 = arith.constant 0.0833333358 : f32
    %255 = vector.broadcast %cst_81 : f32 to vector<8x128xf32>
    %256 = arith.subf %255, %254 : vector<8x128xf32>
    %257 = arith.mulf %245, %256 : vector<8x128xf32>
    %cst_82 = arith.constant 5.000000e-01 : f32
    %258 = vector.broadcast %cst_82 : f32 to vector<8x128xf32>
    %259 = arith.subf %86, %258 : vector<8x128xf32>
    %260 = arith.mulf %259, %243 : vector<8x128xf32>
    %261 = arith.subf %260, %86 : vector<8x128xf32>
    %cst_83 = arith.constant 0.918938517 : f32
    %262 = vector.broadcast %cst_83 : f32 to vector<8x128xf32>
    %263 = arith.addf %261, %262 : vector<8x128xf32>
    %264 = arith.addf %263, %257 : vector<8x128xf32>
    %265 = arith.subf %76, %86 : vector<8x128xf32>
    %266 = arith.mulf %245, %245 : vector<8x128xf32>
    %cst_84 = arith.constant 0.0039682542 : f32
    %267 = vector.broadcast %cst_84 : f32 to vector<8x128xf32>
    %268 = arith.mulf %266, %267 : vector<8x128xf32>
    %cst_85 = arith.constant 0.00833333377 : f32
    %269 = vector.broadcast %cst_85 : f32 to vector<8x128xf32>
    %270 = arith.subf %269, %268 : vector<8x128xf32>
    %271 = arith.mulf %266, %270 : vector<8x128xf32>
    %cst_86 = arith.constant 0.0833333358 : f32
    %272 = vector.broadcast %cst_86 : f32 to vector<8x128xf32>
    %273 = arith.subf %272, %271 : vector<8x128xf32>
    %274 = arith.mulf %266, %273 : vector<8x128xf32>
    %cst_87 = arith.constant 5.000000e-01 : f32
    %275 = vector.broadcast %cst_87 : f32 to vector<8x128xf32>
    %276 = arith.mulf %275, %245 : vector<8x128xf32>
    %277 = arith.subf %243, %276 : vector<8x128xf32>
    %278 = arith.subf %277, %274 : vector<8x128xf32>
    %279 = arith.mulf %265, %278 : vector<8x128xf32>
    %280 = arith.addf %264, %279 : vector<8x128xf32>
    %281 = arith.addf %242, %280 : vector<8x128xf32>
    %cst_88 = arith.constant 1.000000e+00 : f32
    %282 = vector.broadcast %cst_88 : f32 to vector<8x128xf32>
    %283 = arith.addf %69, %282 : vector<8x128xf32>
    %cst_89 = arith.constant 2.000000e+00 : f32
    %284 = vector.broadcast %cst_89 : f32 to vector<8x128xf32>
    %285 = arith.addf %69, %284 : vector<8x128xf32>
    %cst_90 = arith.constant 3.000000e+00 : f32
    %286 = vector.broadcast %cst_90 : f32 to vector<8x128xf32>
    %287 = arith.addf %69, %286 : vector<8x128xf32>
    %cst_91 = arith.constant 4.000000e+00 : f32
    %288 = vector.broadcast %cst_91 : f32 to vector<8x128xf32>
    %289 = arith.addf %69, %288 : vector<8x128xf32>
    %cst_92 = arith.constant 5.000000e+00 : f32
    %290 = vector.broadcast %cst_92 : f32 to vector<8x128xf32>
    %291 = arith.addf %69, %290 : vector<8x128xf32>
    %cst_93 = arith.constant 6.000000e+00 : f32
    %292 = vector.broadcast %cst_93 : f32 to vector<8x128xf32>
    %293 = arith.addf %69, %292 : vector<8x128xf32>
    %cst_94 = arith.constant 7.000000e+00 : f32
    %294 = vector.broadcast %cst_94 : f32 to vector<8x128xf32>
    %295 = arith.addf %69, %294 : vector<8x128xf32>
    %296 = arith.mulf %69, %283 : vector<8x128xf32>
    %297 = arith.mulf %285, %287 : vector<8x128xf32>
    %298 = arith.mulf %296, %297 : vector<8x128xf32>
    %299 = arith.mulf %289, %291 : vector<8x128xf32>
    %300 = arith.mulf %293, %295 : vector<8x128xf32>
    %301 = arith.mulf %299, %300 : vector<8x128xf32>
    %302 = arith.mulf %298, %301 : vector<8x128xf32>
    %cst_95 = arith.constant 8.000000e+00 : f32
    %303 = vector.broadcast %cst_95 : f32 to vector<8x128xf32>
    %304 = arith.addf %69, %303 : vector<8x128xf32>
    %305 = math.log %304 : vector<8x128xf32>
    %cst_96 = arith.constant 1.000000e+00 : f32
    %306 = vector.broadcast %cst_96 : f32 to vector<8x128xf32>
    %307 = arith.divf %306, %304 : vector<8x128xf32>
    %308 = arith.mulf %307, %307 : vector<8x128xf32>
    %cst_97 = arith.constant 5.95238118E-4 : f32
    %309 = vector.broadcast %cst_97 : f32 to vector<8x128xf32>
    %310 = arith.mulf %308, %309 : vector<8x128xf32>
    %cst_98 = arith.constant 7.93650805E-4 : f32
    %311 = vector.broadcast %cst_98 : f32 to vector<8x128xf32>
    %312 = arith.subf %311, %310 : vector<8x128xf32>
    %313 = arith.mulf %308, %312 : vector<8x128xf32>
    %cst_99 = arith.constant 0.00277777785 : f32
    %314 = vector.broadcast %cst_99 : f32 to vector<8x128xf32>
    %315 = arith.subf %314, %313 : vector<8x128xf32>
    %316 = arith.mulf %308, %315 : vector<8x128xf32>
    %cst_100 = arith.constant 0.0833333358 : f32
    %317 = vector.broadcast %cst_100 : f32 to vector<8x128xf32>
    %318 = arith.subf %317, %316 : vector<8x128xf32>
    %319 = arith.mulf %307, %318 : vector<8x128xf32>
    %cst_101 = arith.constant 5.000000e-01 : f32
    %320 = vector.broadcast %cst_101 : f32 to vector<8x128xf32>
    %321 = arith.subf %304, %320 : vector<8x128xf32>
    %322 = arith.mulf %321, %305 : vector<8x128xf32>
    %323 = arith.subf %322, %304 : vector<8x128xf32>
    %cst_102 = arith.constant 0.918938517 : f32
    %324 = vector.broadcast %cst_102 : f32 to vector<8x128xf32>
    %325 = arith.addf %323, %324 : vector<8x128xf32>
    %326 = arith.addf %325, %319 : vector<8x128xf32>
    %327 = arith.addf %281, %326 : vector<8x128xf32>
    %cst_103 = arith.constant 1.000000e+00 : f32
    %328 = vector.broadcast %cst_103 : f32 to vector<8x128xf32>
    %329 = arith.addf %74, %328 : vector<8x128xf32>
    %cst_104 = arith.constant 2.000000e+00 : f32
    %330 = vector.broadcast %cst_104 : f32 to vector<8x128xf32>
    %331 = arith.addf %74, %330 : vector<8x128xf32>
    %cst_105 = arith.constant 3.000000e+00 : f32
    %332 = vector.broadcast %cst_105 : f32 to vector<8x128xf32>
    %333 = arith.addf %74, %332 : vector<8x128xf32>
    %cst_106 = arith.constant 4.000000e+00 : f32
    %334 = vector.broadcast %cst_106 : f32 to vector<8x128xf32>
    %335 = arith.addf %74, %334 : vector<8x128xf32>
    %cst_107 = arith.constant 5.000000e+00 : f32
    %336 = vector.broadcast %cst_107 : f32 to vector<8x128xf32>
    %337 = arith.addf %74, %336 : vector<8x128xf32>
    %cst_108 = arith.constant 6.000000e+00 : f32
    %338 = vector.broadcast %cst_108 : f32 to vector<8x128xf32>
    %339 = arith.addf %74, %338 : vector<8x128xf32>
    %cst_109 = arith.constant 7.000000e+00 : f32
    %340 = vector.broadcast %cst_109 : f32 to vector<8x128xf32>
    %341 = arith.addf %74, %340 : vector<8x128xf32>
    %342 = arith.mulf %74, %329 : vector<8x128xf32>
    %343 = arith.mulf %331, %333 : vector<8x128xf32>
    %344 = arith.mulf %342, %343 : vector<8x128xf32>
    %345 = arith.mulf %335, %337 : vector<8x128xf32>
    %346 = arith.mulf %339, %341 : vector<8x128xf32>
    %347 = arith.mulf %345, %346 : vector<8x128xf32>
    %348 = arith.mulf %344, %347 : vector<8x128xf32>
    %cst_110 = arith.constant 8.000000e+00 : f32
    %349 = vector.broadcast %cst_110 : f32 to vector<8x128xf32>
    %350 = arith.addf %74, %349 : vector<8x128xf32>
    %351 = math.log %350 : vector<8x128xf32>
    %cst_111 = arith.constant 1.000000e+00 : f32
    %352 = vector.broadcast %cst_111 : f32 to vector<8x128xf32>
    %353 = arith.divf %352, %350 : vector<8x128xf32>
    %354 = arith.mulf %353, %353 : vector<8x128xf32>
    %cst_112 = arith.constant 5.95238118E-4 : f32
    %355 = vector.broadcast %cst_112 : f32 to vector<8x128xf32>
    %356 = arith.mulf %354, %355 : vector<8x128xf32>
    %cst_113 = arith.constant 7.93650805E-4 : f32
    %357 = vector.broadcast %cst_113 : f32 to vector<8x128xf32>
    %358 = arith.subf %357, %356 : vector<8x128xf32>
    %359 = arith.mulf %354, %358 : vector<8x128xf32>
    %cst_114 = arith.constant 0.00277777785 : f32
    %360 = vector.broadcast %cst_114 : f32 to vector<8x128xf32>
    %361 = arith.subf %360, %359 : vector<8x128xf32>
    %362 = arith.mulf %354, %361 : vector<8x128xf32>
    %cst_115 = arith.constant 0.0833333358 : f32
    %363 = vector.broadcast %cst_115 : f32 to vector<8x128xf32>
    %364 = arith.subf %363, %362 : vector<8x128xf32>
    %365 = arith.mulf %353, %364 : vector<8x128xf32>
    %cst_116 = arith.constant 5.000000e-01 : f32
    %366 = vector.broadcast %cst_116 : f32 to vector<8x128xf32>
    %367 = arith.subf %350, %366 : vector<8x128xf32>
    %368 = arith.mulf %367, %351 : vector<8x128xf32>
    %369 = arith.subf %368, %350 : vector<8x128xf32>
    %cst_117 = arith.constant 0.918938517 : f32
    %370 = vector.broadcast %cst_117 : f32 to vector<8x128xf32>
    %371 = arith.addf %369, %370 : vector<8x128xf32>
    %372 = arith.addf %371, %365 : vector<8x128xf32>
    %373 = arith.addf %327, %372 : vector<8x128xf32>
    %374 = arith.mulf %302, %348 : vector<8x128xf32>
    %375 = math.log %374 : vector<8x128xf32>
    %376 = arith.subf %373, %375 : vector<8x128xf32>
    %377 = math.log %76 : vector<8x128xf32>
    %cst_118 = arith.constant 1.000000e+00 : f32
    %378 = vector.broadcast %cst_118 : f32 to vector<8x128xf32>
    %379 = arith.divf %378, %76 : vector<8x128xf32>
    %380 = arith.mulf %379, %379 : vector<8x128xf32>
    %cst_119 = arith.constant 5.95238118E-4 : f32
    %381 = vector.broadcast %cst_119 : f32 to vector<8x128xf32>
    %382 = arith.mulf %380, %381 : vector<8x128xf32>
    %cst_120 = arith.constant 7.93650805E-4 : f32
    %383 = vector.broadcast %cst_120 : f32 to vector<8x128xf32>
    %384 = arith.subf %383, %382 : vector<8x128xf32>
    %385 = arith.mulf %380, %384 : vector<8x128xf32>
    %cst_121 = arith.constant 0.00277777785 : f32
    %386 = vector.broadcast %cst_121 : f32 to vector<8x128xf32>
    %387 = arith.subf %386, %385 : vector<8x128xf32>
    %388 = arith.mulf %380, %387 : vector<8x128xf32>
    %cst_122 = arith.constant 0.0833333358 : f32
    %389 = vector.broadcast %cst_122 : f32 to vector<8x128xf32>
    %390 = arith.subf %389, %388 : vector<8x128xf32>
    %391 = arith.mulf %379, %390 : vector<8x128xf32>
    %cst_123 = arith.constant 5.000000e-01 : f32
    %392 = vector.broadcast %cst_123 : f32 to vector<8x128xf32>
    %393 = arith.subf %76, %392 : vector<8x128xf32>
    %394 = arith.mulf %393, %377 : vector<8x128xf32>
    %395 = arith.subf %394, %76 : vector<8x128xf32>
    %cst_124 = arith.constant 0.918938517 : f32
    %396 = vector.broadcast %cst_124 : f32 to vector<8x128xf32>
    %397 = arith.addf %395, %396 : vector<8x128xf32>
    %398 = arith.addf %397, %391 : vector<8x128xf32>
    %399 = arith.subf %376, %398 : vector<8x128xf32>
    %cst_125 = arith.constant 0.000000e+00 : f32
    %400 = vector.broadcast %cst_125 : f32 to vector<8x128xf32>
    %401 = arith.cmpf ogt, %11, %400 : vector<8x128xf32>
    %402 = arith.mulf %48, %399 : vector<8x128xf32>
    %cst_126 = arith.constant 0.000000e+00 : f32
    %403 = vector.broadcast %cst_126 : f32 to vector<8x128xf32>
    %404 = arith.select %401, %402, %403 : vector<8x128xi1>, vector<8x128xf32>
    %cst_127 = arith.constant dense<0.000000e+00> : vector<128xf32>
    %405 = vector.multi_reduction <add>, %404, %cst_127 [0] : vector<8x128xf32> to vector<128xf32>
    %406 = vector.shape_cast %405 : vector<128xf32> to vector<1x128xf32>
    %cst_128 = arith.constant 1.000000e+00 : f32
    %407 = vector.broadcast %cst_128 : f32 to vector<1x128xf32>
    %408 = arith.maximumf %13, %407 : vector<1x128xf32>
    %409 = arith.divf %406, %408 : vector<1x128xf32>
    %cst_129 = arith.constant dense<0.000000e+00> : vector<1xf32>
    %410 = vector.multi_reduction <add>, %409, %cst_129 [1] : vector<1x128xf32> to vector<1xf32>
    %411 = vector.shape_cast %410 : vector<1xf32> to vector<1x1xf32>
    %412 = vector.shape_cast %411 : vector<1x1xf32> to vector<1x1x1xf32>
    %413 = vector.shape_cast %412 : vector<1x1x1xf32> to vector<1x1x1xf32>
    %414 = vector.broadcast %413 : vector<1x1x1xf32> to vector<1x8x128xf32>
    %c0_130 = arith.constant 0 : index
    %c0_131 = arith.constant 0 : index
    %c0_132 = arith.constant 0 : index
    %415 = vector.load %arg2[%c0_130, %c0_131, %c0_132] : memref<1x8x128xf32, #tpu.memory_space<vmem>>, vector<1x8x128xf32>
    tpu.vector_store %arg2[%c0_130, %c0_131, %c0_132], %414 {strides = array<i32>} : memref<1x8x128xf32, #tpu.memory_space<vmem>>, vector<1x8x128xf32>,
    return
  }
  func.func @transform_0(%arg0: i32) -> (i32, i32, i32) {
    %c0_i32 = arith.constant 0 : i32
    %c0_i32_0 = arith.constant 0 : i32
    %c0_i32_1 = arith.constant 0 : i32
    return %c0_i32, %c0_i32_0, %arg0 : i32, i32, i32
  }
  func.func @transform_1(%arg0: i32) -> (i32, i32, i32) {
    %c0_i32 = arith.constant 0 : i32
    %c0_i32_0 = arith.constant 0 : i32
    %c0_i32_1 = arith.constant 0 : i32
    return %arg0, %c0_i32, %c0_i32_0 : i32, i32, i32
  }
}

</mosaic_0001>

<llo_original>
// kernel: tpu_custom_call.1
$region0: #{tpu_custom_call.1}
  #allocation0 [shape = 'u32[]', space=smem, size = 0x4, offset = 0x4, fixed_abs, tag = 'smem constant byte address 0x4 - core index']
  #allocation1 [shape = 'u32[144,128]{1,0:T(1,128)}', space=vmem, size = 0x12000, scoped, tag = 'internal scratch']
  %s0 = inlined_call_operand.hbm [shape: f32[6,8,128], index: 0, kind: input, shape index: {}]
  %s1 = inlined_call_operand.hbm [shape: f32[1,8,128], index: 1, kind: output, shape index: {}]
  %s2 = sld [smem:[#allocation0]]
  $region18: #{tpu_custom_call.1} parent=0
    _
  %s4 = ssub.s32 1, %s2
  %s5 = scalar_select 0, %s4, %s2
  $region1: #{tpu_custom_call.1} parent=0
    #allocation2 [shape = 'u8[24576]{0}', space=vmem, size = 0x6000, scoped, tag = 'input window, operand 0, single buffered']
    #allocation3 [shape = 's32[1]{0}', space=sflag, size = 0x4, scoped, tag = 'scoped memory for tpu_custom_call.1']
    #allocation4 [shape = 's32[1]{0}', space=sflag, size = 0x4, scoped, tag = 'scoped memory for tpu_custom_call.1']
    #allocation5 [shape = 'u8[4096]{0}', space=vmem, size = 0x1000, scoped, tag = 'output window, operand 0, single buffered']
    %6 = vsyncpa [#allocation3], 0
    %7 = vsyncpa [#allocation4], 0
    // Predicated region
    $region2: #{tpu_custom_call.1} parent=1 // pred_check
      _
    $region3: #{tpu_custom_call.1} parent=1 // pred_check_branch
      %9 = sbr.rel (0) target = $region5
    $region4: #{tpu_custom_call.1} parent=1 // pred_region
      %s11 = ssub.s32 768, 768
      %12 = vsyncadd [#allocation3], %s11
      %s13 = sshll.u32 [#allocation2], 4
      %s14 = int_to_ptr.vmem [resolvable:$true] %s13
      %19 = dma.hbm_to_vmem [thread:$0]  %s0, 768, %s14, [#allocation3], 128, 128, 8
    $region5: #{tpu_custom_call.1} parent=1 // pred_fallthru
      _
    // Predicated region
    $region6: #{tpu_custom_call.1} parent=1 // pred_check
      _
    $region7: #{tpu_custom_call.1} parent=1 // pred_check_branch
      %21 = sbr.rel (0) target = $region9
    $region8: #{tpu_custom_call.1} parent=1 // pred_region
      %22 = dma.done [#allocation3], 768
    $region9: #{tpu_custom_call.1} parent=1 // pred_fallthru
      _
    %v23 = vld [vmem:[#allocation2] sm:$0xff]
    %s24 = scalar_lea.vmem [#allocation2], 8
    %v25 = vld [vmem:[%s24] sm:$0xff]
    %s26 = scalar_lea.vmem [#allocation2], 16
    %v27 = vld [vmem:[%s26] sm:$0xff]
    %s28 = scalar_lea.vmem [#allocation2], 24
    %v29 = vld [vmem:[%s28] sm:$0xff]
    %s30 = scalar_lea.vmem [#allocation2], 32
    %v31 = vld [vmem:[%s30] sm:$0xff]
    %s32 = scalar_lea.vmem [#allocation2], 40
    %v33 = vld [vmem:[%s32] sm:$0xff]
    %v34 = vrot.slane %v33, 4
    %v35 = vadd.f32 %v33, %v34
    %v36 = vrot.slane %v35, 2
    %v37 = vadd.f32 %v35, %v36
    %v38 = vrot.slane %v37, 1
    %v39 = vadd.f32 %v37, %v38
    %vm40 = vcmp.eq.f32.partialorder %v31, 0.0
    %v41 = vsel %vm40, %v33, 0.0
    %v42 = vrot.slane %v41, 4
    %v43 = vadd.f32 %v41, %v42
    %v44 = vrot.slane %v43, 2
    %v45 = vadd.f32 %v43, %v44
    %v46 = vrot.slane %v45, 1
    %v47 = vadd.f32 %v45, %v46
    %vm48 = vcmp.eq.f32.partialorder %v31, 1.0
    %v49 = vsel %vm48, %v33, 0.0
    %v50 = vrot.slane %v49, 4
    %v51 = vadd.f32 %v49, %v50
    %v52 = vrot.slane %v51, 2
    %v53 = vadd.f32 %v51, %v52
    %v54 = vrot.slane %v53, 1
    %v55 = vadd.f32 %v53, %v54
    %v56 = vsub.f32 %v39, %v47
    %v57 = vsub.f32 %v56, %v55
    %v58 = vmul.f32 %v39, 0.33333334
    %v59 = vrcp.pop %v47
    %v60 = vmul.f32 %v58, %v59
    %v61 = vrcp.pop %v55
    %v62 = vmul.f32 %v58, %v61
    %v63 = vrcp.pop %v57
    %v64 = vmul.f32 %v58, %v63
    %v65 = vsel %vm48, %v62, %v64
    %v66 = vsel %vm40, %v60, %v65
    %v67 = vmul.f32 %v23, 0.5
    %v68 = vtanh.pop %v67
    %v69 = vmul.f32 %v68, 0.5
    %v70 = vadd.f32 %v69, 0.5
    %v71 = vmul.f32 %v25, 0.5
    %v72 = vtanh.pop %v71
    %v73 = vmul.f32 %v72, 0.5
    %v74 = vadd.f32 %v73, 0.5
    %v75 = vmul.f32 %v74, 7.0
    %v76 = vadd.f32 %v75, 5.0
    %v77 = vmul.f32 %v76, %v70
    %v78 = vadd.f32 %v77, 1.0
    %v79 = vsub.f32 1.0, %v70
    %v80 = vmul.f32 %v76, %v79
    %v81 = vadd.f32 %v80, 1.0
    %v82 = vadd.f32 %v76, 2.0
    %v83 = vmul.f32 %v29, %v27
    %v84 = vadd.f32 %v83, 1.0
    %v85 = vsub.f32 1.0, %v27
    %v86 = vmul.f32 %v29, %v85
    %v87 = vadd.f32 %v86, 1.0
    %v88 = vadd.f32 %v29, 2.0
    %v89 = vadd.f32 %v84, 1.0
    %v90 = vadd.f32 %v84, 2.0
    %v91 = vadd.f32 %v84, 3.0
    %v92 = vadd.f32 %v84, 4.0
    %v93 = vadd.f32 %v84, 5.0
    %v94 = vadd.f32 %v84, 6.0
    %v95 = vadd.f32 %v84, 7.0
    %v96 = vmul.f32 %v84, %v89
    %v97 = vmul.f32 %v90, %v91
    %v98 = vmul.f32 %v92, %v93
    %v99 = vmul.f32 %v94, %v95
    %v100 = vmul.f32 %v96, %v97
    %v101 = vmul.f32 %v98, %v99
    %v102 = vmul.f32 %v100, %v101
    %v103 = vadd.f32 %v84, %v89
    %v104 = vmul.f32 %v103, %v97
    %v105 = vadd.f32 %v90, %v91
    %v106 = vmul.f32 %v105, %v96
    %v107 = vadd.f32 %v104, %v106
    %v108 = vadd.f32 %v92, %v93
    %v109 = vmul.f32 %v108, %v99
    %v110 = vadd.f32 %v94, %v95
    %v111 = vmul.f32 %v110, %v98
    %v112 = vadd.f32 %v109, %v111
    %v113 = vmul.f32 %v107, %v101
    %v114 = vmul.f32 %v112, %v100
    %v115 = vadd.f32 %v113, %v114
    %v116 = vrcp.pop %v102
    %v117 = vmul.f32 %v115, %v116
    %v118 = vadd.f32 %v84, 8.0
    %v119 = vlog2.pop %v118
    %v120 = vmul.f32 %v119, 0.6931472
    %v121 = vrcp.pop %v118
    %v122 = vmul.f32 1.0, %v121
    %v123 = vsub.f32 %v84, %v78
    %v124 = vmul.f32 %v122, %v122
    %v125 = vmul.f32 %v124, 0.003968254
    %v126 = vsub.f32 0.008333334, %v125
    %v127 = vmul.f32 %v124, %v126
    %v128 = vsub.f32 0.083333336, %v127
    %v129 = vmul.f32 %v124, %v128
    %v130 = vmul.f32 %v122, 0.5
    %v131 = vsub.f32 %v120, %v130
    %v132 = vsub.f32 %v131, %v129
    %v133 = vsub.f32 %v132, %v117
    %v134 = vmul.f32 %v123, %v133
    %v135 = vmul.f32 %v124, 0.0005952381
    %v136 = vsub.f32 0.0007936508, %v135
    %v137 = vmul.f32 %v124, %v136
    %v138 = vsub.f32 0.0027777778, %v137
    %v139 = vmul.f32 %v124, %v138
    %v140 = vsub.f32 0.083333336, %v139
    %v141 = vmul.f32 %v122, %v140
    %v142 = vsub.f32 %v118, 0.5
    %v143 = vmul.f32 %v142, %v120
    %v144 = vsub.f32 %v143, %v118
    %v145 = vadd.f32 %v144, 0.9189385
    %v146 = vadd.f32 %v145, %v141
    %v147 = vsub.f32 %v134, %v146
    %v148 = vadd.f32 %v87, 1.0
    %v149 = vadd.f32 %v87, 2.0
    %v150 = vadd.f32 %v87, 3.0
    %v151 = vadd.f32 %v87, 4.0
    %v152 = vadd.f32 %v87, 5.0
    %v153 = vadd.f32 %v87, 6.0
    %v154 = vadd.f32 %v87, 7.0
    %v155 = vmul.f32 %v87, %v148
    %v156 = vmul.f32 %v149, %v150
    %v157 = vmul.f32 %v151, %v152
    %v158 = vmul.f32 %v153, %v154
    %v159 = vmul.f32 %v155, %v156
    %v160 = vmul.f32 %v157, %v158
    %v161 = vmul.f32 %v159, %v160
    %v162 = vadd.f32 %v87, %v148
    %v163 = vmul.f32 %v162, %v156
    %v164 = vadd.f32 %v149, %v150
    %v165 = vmul.f32 %v164, %v155
    %v166 = vadd.f32 %v163, %v165
    %v167 = vadd.f32 %v151, %v152
    %v168 = vmul.f32 %v167, %v158
    %v169 = vadd.f32 %v153, %v154
    %v170 = vmul.f32 %v169, %v157
    %v171 = vadd.f32 %v168, %v170
    %v172 = vmul.f32 %v166, %v160
    %v173 = vmul.f32 %v171, %v159
    %v174 = vadd.f32 %v172, %v173
    %v175 = vrcp.pop %v161
    %v176 = vmul.f32 %v174, %v175
    %v177 = vadd.f32 %v87, 8.0
    %v178 = vlog2.pop %v177
    %v179 = vmul.f32 %v178, 0.6931472
    %v180 = vrcp.pop %v177
    %v181 = vmul.f32 1.0, %v180
    %v182 = vsub.f32 %v87, %v81
    %v183 = vmul.f32 %v181, %v181
    %v184 = vmul.f32 %v183, 0.003968254
    %v185 = vsub.f32 0.008333334, %v184
    %v186 = vmul.f32 %v183, %v185
    %v187 = vsub.f32 0.083333336, %v186
    %v188 = vmul.f32 %v183, %v187
    %v189 = vmul.f32 %v181, 0.5
    %v190 = vsub.f32 %v179, %v189
    %v191 = vsub.f32 %v190, %v188
    %v192 = vsub.f32 %v191, %v176
    %v193 = vmul.f32 %v182, %v192
    %v194 = vmul.f32 %v183, 0.0005952381
    %v195 = vsub.f32 0.0007936508, %v194
    %v196 = vmul.f32 %v183, %v195
    %v197 = vsub.f32 0.0027777778, %v196
    %v198 = vmul.f32 %v183, %v197
    %v199 = vsub.f32 0.083333336, %v198
    %v200 = vmul.f32 %v181, %v199
    %v201 = vsub.f32 %v177, 0.5
    %v202 = vmul.f32 %v201, %v179
    %v203 = vsub.f32 %v202, %v177
    %v204 = vadd.f32 %v203, 0.9189385
    %v205 = vadd.f32 %v204, %v200
    %v206 = vsub.f32 %v193, %v205
    %v207 = vadd.f32 %v147, %v206
    %v208 = vmul.f32 %v102, %v161
    %v209 = vlog2.pop %v208
    %v210 = vmul.f32 %v209, 0.6931472
    %v211 = vadd.f32 %v207, %v210
    %v212 = vlog2.pop %v88
    %v213 = vmul.f32 %v212, 0.6931472
    %v214 = vrcp.pop %v88
    %v215 = vmul.f32 1.0, %v214
    %v216 = vmul.f32 %v215, %v215
    %v217 = vmul.f32 %v216, 0.0005952381
    %v218 = vsub.f32 0.0007936508, %v217
    %v219 = vmul.f32 %v216, %v218
    %v220 = vsub.f32 0.0027777778, %v219
    %v221 = vmul.f32 %v216, %v220
    %v222 = vsub.f32 0.083333336, %v221
    %v223 = vmul.f32 %v215, %v222
    %v224 = vsub.f32 %v88, 0.5
    %v225 = vmul.f32 %v224, %v213
    %v226 = vsub.f32 %v225, %v88
    %v227 = vadd.f32 %v226, 0.9189385
    %v228 = vadd.f32 %v227, %v223
    %v229 = vsub.f32 %v82, %v88
    %v230 = vmul.f32 %v216, 0.003968254
    %v231 = vsub.f32 0.008333334, %v230
    %v232 = vmul.f32 %v216, %v231
    %v233 = vsub.f32 0.083333336, %v232
    %v234 = vmul.f32 %v216, %v233
    %v235 = vmul.f32 %v215, 0.5
    %v236 = vsub.f32 %v213, %v235
    %v237 = vsub.f32 %v236, %v234
    %v238 = vmul.f32 %v229, %v237
    %v239 = vadd.f32 %v228, %v238
    %v240 = vadd.f32 %v211, %v239
    %v241 = vadd.f32 %v78, 1.0
    %v242 = vadd.f32 %v78, 2.0
    %v243 = vadd.f32 %v78, 3.0
    %v244 = vadd.f32 %v78, 4.0
    %v245 = vadd.f32 %v78, 5.0
    %v246 = vadd.f32 %v78, 6.0
    %v247 = vadd.f32 %v78, 7.0
    %v248 = vmul.f32 %v78, %v241
    %v249 = vmul.f32 %v242, %v243
    %v250 = vmul.f32 %v248, %v249
    %v251 = vmul.f32 %v244, %v245
    %v252 = vmul.f32 %v246, %v247
    %v253 = vmul.f32 %v251, %v252
    %v254 = vmul.f32 %v250, %v253
    %v255 = vadd.f32 %v78, 8.0
    %v256 = vlog2.pop %v255
    %v257 = vmul.f32 %v256, 0.6931472
    %v258 = vrcp.pop %v255
    %v259 = vmul.f32 1.0, %v258
    %v260 = vmul.f32 %v259, %v259
    %v261 = vmul.f32 %v260, 0.0005952381
    %v262 = vsub.f32 0.0007936508, %v261
    %v263 = vmul.f32 %v260, %v262
    %v264 = vsub.f32 0.0027777778, %v263
    %v265 = vmul.f32 %v260, %v264
    %v266 = vsub.f32 0.083333336, %v265
    %v267 = vmul.f32 %v259, %v266
    %v268 = vsub.f32 %v255, 0.5
    %v269 = vmul.f32 %v268, %v257
    %v270 = vsub.f32 %v269, %v255
    %v271 = vadd.f32 %v270, 0.9189385
    %v272 = vadd.f32 %v271, %v267
    %v273 = vadd.f32 %v240, %v272
    %v274 = vadd.f32 %v81, 1.0
    %v275 = vadd.f32 %v81, 2.0
    %v276 = vadd.f32 %v81, 3.0
    %v277 = vadd.f32 %v81, 4.0
    %v278 = vadd.f32 %v81, 5.0
    %v279 = vadd.f32 %v81, 6.0
    %v280 = vadd.f32 %v81, 7.0
    %v281 = vmul.f32 %v81, %v274
    %v282 = vmul.f32 %v275, %v276
    %v283 = vmul.f32 %v281, %v282
    %v284 = vmul.f32 %v277, %v278
    %v285 = vmul.f32 %v279, %v280
    %v286 = vmul.f32 %v284, %v285
    %v287 = vmul.f32 %v283, %v286
    %v288 = vadd.f32 %v81, 8.0
    %v289 = vlog2.pop %v288
    %v290 = vmul.f32 %v289, 0.6931472
    %v291 = vrcp.pop %v288
    %v292 = vmul.f32 1.0, %v291
    %v293 = vmul.f32 %v292, %v292
    %v294 = vmul.f32 %v293, 0.0005952381
    %v295 = vsub.f32 0.0007936508, %v294
    %v296 = vmul.f32 %v293, %v295
    %v297 = vsub.f32 0.0027777778, %v296
    %v298 = vmul.f32 %v293, %v297
    %v299 = vsub.f32 0.083333336, %v298
    %v300 = vmul.f32 %v292, %v299
    %v301 = vsub.f32 %v288, 0.5
    %v302 = vmul.f32 %v301, %v290
    %v303 = vsub.f32 %v302, %v288
    %v304 = vadd.f32 %v303, 0.9189385
    %v305 = vadd.f32 %v304, %v300
    %v306 = vadd.f32 %v273, %v305
    %v307 = vmul.f32 %v254, %v287
    %v308 = vlog2.pop %v307
    %v309 = vmul.f32 %v308, 0.6931472
    %v310 = vsub.f32 %v306, %v309
    %v311 = vlog2.pop %v82
    %v312 = vmul.f32 %v311, 0.6931472
    %v313 = vrcp.pop %v82
    %v314 = vmul.f32 1.0, %v313
    %v315 = vmul.f32 %v314, %v314
    %v316 = vmul.f32 %v315, 0.0005952381
    %v317 = vsub.f32 0.0007936508, %v316
    %v318 = vmul.f32 %v315, %v317
    %v319 = vsub.f32 0.0027777778, %v318
    %v320 = vmul.f32 %v315, %v319
    %v321 = vsub.f32 0.083333336, %v320
    %v322 = vmul.f32 %v314, %v321
    %v323 = vsub.f32 %v82, 0.5
    %v324 = vmul.f32 %v323, %v312
    %v325 = vsub.f32 %v324, %v82
    %v326 = vadd.f32 %v325, 0.9189385
    %v327 = vadd.f32 %v326, %v322
    %v328 = vsub.f32 %v310, %v327
    %vm329 = vcmp.gt.f32.partialorder %v33, 0.0
    %v330 = vmul.f32 %v66, %v328
    %v331 = vsel %vm329, %v330, 0.0
    %v332 = vrot.slane %v331, 4
    %v333 = vadd.f32 %v331, %v332
    %v334 = vrot.slane %v333, 2
    %v335 = vadd.f32 %v333, %v334
    %v336 = vrot.slane %v335, 1
    %v337 = vadd.f32 %v335, %v336
    %v338 = vmax.f32 %v39, 1.0
    %v339 = vrcp.pop %v338
    %v340 = vmul.f32 %v337, %v339
    %341 = vadd.xlane.f32.xlu0 %v340
    %v342 = vpop.xlane.xlu0 %341
    %343 = vst [vmem:[#allocation5] sm:$0xff] %v342
    // Predicated region
    $region10: #{tpu_custom_call.1} parent=1 // pred_check
      _
    $region11: #{tpu_custom_call.1} parent=1 // pred_check_branch
      %345 = sbr.rel (0) target = $region13
    $region12: #{tpu_custom_call.1} parent=1 // pred_region
      %s347 = ssub.s32 128, 128
      %348 = vsyncadd [#allocation4], %s347
      %s350 = sshll.u32 [#allocation5], 4
      %s351 = int_to_ptr.vmem [resolvable:$true] %s350
      %353 = dma.vmem_to_hbm [thread:$0]  %s351, 128, %s1, [#allocation4]
    $region13: #{tpu_custom_call.1} parent=1 // pred_fallthru
      _
    // Predicated region
    $region14: #{tpu_custom_call.1} parent=1 // pred_check
      _
    $region15: #{tpu_custom_call.1} parent=1 // pred_check_branch
      %355 = sbr.rel (0) target = $region17
    $region16: #{tpu_custom_call.1} parent=1 // pred_region
      %356 = dma.done [#allocation4], 128
    $region17: #{tpu_custom_call.1} parent=1 // pred_fallthru
      _
    %357 = vsyncpa [#allocation3], 1
    %358 = vsyncpa [#allocation4], 1

</llo_original>
